<compile_context>
chip_gen: v7x
topology: tpu7x:2x2x1
jax: 0.10.0
libtpu: 0.0.40
codegen_flags: <defaults>
</compile_context>

<pallas_src>
import functools

import jax
import jax.numpy as jnp
from jax.experimental import pallas as pl
from jax.experimental.pallas import tpu as pltpu

F32 = jnp.float32


def _round_up(x, m):
    return ((x + m - 1) // m) * m


# ---------------------------------------------------------------------------
# Generic fused Linear kernels. Operands here are at most a few hundred rows
# and a couple of MiB, so a single resident block is optimal.
# TODO(synk): if M grows large, tile the M axis with a 'parallel' grid.
# ---------------------------------------------------------------------------
def _linear1_kernel(x_ref, w_ref, b_ref, o_ref, *, act):
    y = jnp.dot(x_ref[...], w_ref[...], preferred_element_type=jnp.float32)
    y = y + b_ref[...]
    if act == "relu":
        y = jnp.maximum(y, 0.0)
    o_ref[...] = y.astype(o_ref.dtype)


def linear1(x, w, b, act=None):
    M, K = x.shape
    K2, N = w.shape
    assert K == K2
    return pl.pallas_call(
        functools.partial(_linear1_kernel, act=act),
        out_shape=jax.ShapeDtypeStruct((M, N), F32),
        grid=(1,),
        in_specs=[
            pl.BlockSpec((M, K), lambda i: (0, 0)),
            pl.BlockSpec((K, N), lambda i: (0, 0)),
            pl.BlockSpec((1, N), lambda i: (0, 0)),
        ],
        out_specs=pl.BlockSpec((M, N), lambda i: (0, 0)),
        compiler_params=pltpu.CompilerParams(
            dimension_semantics=("arbitrary",)),
    )(x, w, b.reshape(1, N))


def _linear2_kernel(x_ref, w1_ref, b1_ref, w2_ref, b2_ref, o_ref, *, act1, act2):
    h = jnp.dot(x_ref[...], w1_ref[...], preferred_element_type=jnp.float32)
    h = h + b1_ref[...]
    if act1 == "relu":
        h = jnp.maximum(h, 0.0)
    y = jnp.dot(h, w2_ref[...], preferred_element_type=jnp.float32)
    y = y + b2_ref[...]
    if act2 == "relu":
        y = jnp.maximum(y, 0.0)
    o_ref[...] = y.astype(o_ref.dtype)


def linear2(x, w1, b1, w2, b2, act1=None, act2=None):
    """Fused y = act2(act1(x@w1+b1) @ w2 + b2); intermediate stays in VMEM."""
    M, K = x.shape
    N1 = w1.shape[1]
    N2 = w2.shape[1]
    return pl.pallas_call(
        functools.partial(_linear2_kernel, act1=act1, act2=act2),
        out_shape=jax.ShapeDtypeStruct((M, N2), F32),
        grid=(1,),
        in_specs=[
            pl.BlockSpec((M, K), lambda i: (0, 0)),
            pl.BlockSpec((K, N1), lambda i: (0, 0)),
            pl.BlockSpec((1, N1), lambda i: (0, 0)),
            pl.BlockSpec((N1, N2), lambda i: (0, 0)),
            pl.BlockSpec((1, N2), lambda i: (0, 0)),
        ],
        out_specs=pl.BlockSpec((M, N2), lambda i: (0, 0)),
        compiler_params=pltpu.CompilerParams(
            dimension_semantics=("arbitrary",)),
    )(x, w1, b1.reshape(1, N1), w2, b2.reshape(1, N2))


# ---------------------------------------------------------------------------
# Bidirectional GRU recurrence, both directions fused in ONE pallas_call.
# Input projections gi = x @ W_ih + b_ih are precomputed (hoisted out of the
# serial loop); gates are packed [r | z | n] so each step does a single
# (B, HP) @ (HP, 3*HP) matmul per direction.  PyTorch gate math:
#   r = sig(gi_r + gh_r); z = sig(gi_z + gh_z); n = tanh(gi_n + r*gh_n)
#   h' = (1-z)*n + z*h
# torch.relu(gru_output) is fused onto the output write only (the un-ReLU'd
# hidden feeds the recurrence, matching the torch model).
# ---------------------------------------------------------------------------
def _bigru_kernel(gif_ref, gib_ref, whhf_ref, bhhf_ref, whhb_ref, bhhb_ref,
                  of_ref, ob_ref, hf_ref, hb_ref, *, hp):
    @pl.when(pl.program_id(0) == 0)
    def _():
        hf_ref[...] = jnp.zeros_like(hf_ref)
        hb_ref[...] = jnp.zeros_like(hb_ref)

    def cell(gi, h, whh_ref, bhh_ref):
        gh = jnp.dot(h, whh_ref[...], preferred_element_type=jnp.float32)
        gh = gh + bhh_ref[...]
        r = jax.nn.sigmoid(gi[:, 0:hp] + gh[:, 0:hp])
        z = jax.nn.sigmoid(gi[:, hp:2 * hp] + gh[:, hp:2 * hp])
        n = jnp.tanh(gi[:, 2 * hp:3 * hp] + r * gh[:, 2 * hp:3 * hp])
        return (1.0 - z) * n + z * h

    h_f = cell(gif_ref[0], hf_ref[...], whhf_ref, bhhf_ref)
    h_b = cell(gib_ref[0], hb_ref[...], whhb_ref, bhhb_ref)
    hf_ref[...] = h_f
    hb_ref[...] = h_b
    of_ref[0] = jnp.maximum(h_f, 0.0).astype(of_ref.dtype)
    ob_ref[0] = jnp.maximum(h_b, 0.0).astype(ob_ref.dtype)


def bigru(gi_f, gi_b, whh_f, bhh_f, whh_b, bhh_b, hp):
    T, B, G3 = gi_f.shape
    grid_spec = pltpu.PrefetchScalarGridSpec(
        num_scalar_prefetch=0,
        grid=(T,),
        in_specs=[
            pl.BlockSpec((1, B, G3), lambda t: (t, 0, 0)),
            pl.BlockSpec((1, B, G3), lambda t: (T - 1 - t, 0, 0)),
            pl.BlockSpec((hp, G3), lambda t: (0, 0)),
            pl.BlockSpec((1, G3), lambda t: (0, 0)),
            pl.BlockSpec((hp, G3), lambda t: (0, 0)),
            pl.BlockSpec((1, G3), lambda t: (0, 0)),
        ],
        out_specs=(
            pl.BlockSpec((1, B, hp), lambda t: (t, 0, 0)),
            pl.BlockSpec((1, B, hp), lambda t: (T - 1 - t, 0, 0)),
        ),
        scratch_shapes=[pltpu.VMEM((B, hp), F32), pltpu.VMEM((B, hp), F32)],
    )
    return pl.pallas_call(
        functools.partial(_bigru_kernel, hp=hp),
        out_shape=(jax.ShapeDtypeStruct((T, B, hp), F32),
                   jax.ShapeDtypeStruct((T, B, hp), F32)),
        grid_spec=grid_spec,
        compiler_params=pltpu.CompilerParams(
            dimension_semantics=("arbitrary",)),   # serial recurrence
    )(gi_f, gi_b, whh_f, bhh_f, whh_b, bhh_b)


# ---------------------------------------------------------------------------
# Sequence head: fc chain (200->512 relu ->256), tanh, softmax over the
# position axis, and the attention pooling collapsed algebraically:
#   out[j] = sum_a sum_k att[k,a]*rnn[k,j]/10 = sum_k (sum_a att[k,a])*rnn[k,j]/10
# One grid step per sequence ('parallel' so v7x can shard across cores).
# ---------------------------------------------------------------------------
def _seq_head_kernel(rnn_ref, w1_ref, b1_ref, w2_ref, b2_ref, o_ref):
    r = rnn_ref[0]                                               # (B, 2*HP)
    h = jnp.dot(r, w1_ref[...], preferred_element_type=jnp.float32) + b1_ref[...]
    h = jnp.maximum(h, 0.0)
    a = jnp.dot(h, w2_ref[...], preferred_element_type=jnp.float32) + b2_ref[...]
    a = jnp.tanh(a)                                              # (B, A)
    a = a - jnp.max(a, axis=0, keepdims=True)                    # softmax over positions
    e = jnp.exp(a)
    inv = pl.reciprocal(jnp.sum(e, axis=0, keepdims=True), approx=True)
    att = e * inv                                                # (B, A)
    wsum = jnp.sum(att, axis=1, keepdims=True)                   # (B, 1)
    pooled = jnp.sum(wsum * r, axis=0, keepdims=True) * 0.1      # (1, 2*HP)
    o_ref[0] = pooled.astype(o_ref.dtype)


def seq_head(rnn, w1, b1, w2, b2):
    T, B, D = rnn.shape
    N1 = w1.shape[1]
    A = w2.shape[1]
    out = pl.pallas_call(
        _seq_head_kernel,
        out_shape=jax.ShapeDtypeStruct((T, 1, D), F32),
        grid=(T,),
        in_specs=[
            pl.BlockSpec((1, B, D), lambda t: (t, 0, 0)),
            pl.BlockSpec((D, N1), lambda t: (0, 0)),
            pl.BlockSpec((1, N1), lambda t: (0, 0)),
            pl.BlockSpec((N1, A), lambda t: (0, 0)),
            pl.BlockSpec((1, A), lambda t: (0, 0)),
        ],
        out_specs=pl.BlockSpec((1, 1, D), lambda t: (t, 0, 0)),
        compiler_params=pltpu.CompilerParams(
            dimension_semantics=("parallel",)),
    )(rnn, w1, b1.reshape(1, N1), w2, b2.reshape(1, A))
    return out.reshape(T, D)


# ---------------------------------------------------------------------------
# Fused graph branch: GIN1(relu) -> GIN2(relu) -> global max/mean pool,
# batched over a leading "variant" axis (original nodes and augmented nodes).
# Adjacency, GIN weights and membership masks stay resident across the grid.
# ---------------------------------------------------------------------------
def _graph_embed_kernel(x_ref, adj_ref, w1_ref, b1_ref, w2_ref, b2_ref,
                        m_ref, invc_ref, o_ref, *, f2p):
    x = x_ref[0]                                                 # (Nn, NFP)
    adj = adj_ref[...]
    # GINConv(eps=0): Linear(x + A @ x), then ReLU — twice, fused.
    agg = jnp.dot(adj, x, preferred_element_type=jnp.float32) + x
    h1 = jnp.dot(agg, w1_ref[...], preferred_element_type=jnp.float32) + b1_ref[...]
    h1 = jnp.maximum(h1, 0.0)
    agg = jnp.dot(adj, h1, preferred_element_type=jnp.float32) + h1
    h2 = jnp.dot(agg, w2_ref[...], preferred_element_type=jnp.float32) + b2_ref[...]
    h2 = jnp.maximum(h2, 0.0)                                    # (Nn, f2p)

    m = m_ref[...]                                               # (G, Nn) one-hot membership
    Gn, Nn = m.shape
    # Vectorized per-graph max pool. NOTE: assumes every graph has >=1 node.
    neg = jnp.float32(-3.0e38)
    mask3 = jnp.broadcast_to((m > 0.5)[:, :, None], (Gn, Nn, f2p))
    h2b = jnp.broadcast_to(h2[None], (Gn, Nn, f2p))
    gmax = jnp.max(jnp.where(mask3, h2b, neg), axis=1)           # (G, f2p)
    gmean = jnp.dot(m, h2, preferred_element_type=jnp.float32) * invc_ref[...]
    o_ref[0, :, 0:f2p] = gmax.astype(o_ref.dtype)
    o_ref[0, :, f2p:2 * f2p] = gmean.astype(o_ref.dtype)


def graph_embed_pool(x_stack, adj, w1, b1, w2, b2, member, inv_counts):
    V, Nn, NFp = x_stack.shape
    F1 = w1.shape[1]
    F2 = w2.shape[1]
    G = member.shape[0]
    return pl.pallas_call(
        functools.partial(_graph_embed_kernel, f2p=F2),
        out_shape=jax.ShapeDtypeStruct((V, G, 2 * F2), F32),
        grid=(V,),
        in_specs=[
            pl.BlockSpec((1, Nn, NFp), lambda v: (v, 0, 0)),
            pl.BlockSpec((Nn, Nn), lambda v: (0, 0)),
            pl.BlockSpec((NFp, F1), lambda v: (0, 0)),
            pl.BlockSpec((1, F1), lambda v: (0, 0)),
            pl.BlockSpec((F1, F2), lambda v: (0, 0)),
            pl.BlockSpec((1, F2), lambda v: (0, 0)),
            pl.BlockSpec((G, Nn), lambda v: (0, 0)),
            pl.BlockSpec((G, 1), lambda v: (0, 0)),
        ],
        out_specs=pl.BlockSpec((1, G, 2 * F2), lambda v: (v, 0, 0)),
        compiler_params=pltpu.CompilerParams(
            dimension_semantics=("parallel",)),
    )(x_stack, adj, w1, b1.reshape(1, F1), w2, b2.reshape(1, F2),
      member, inv_counts)


# ---------------------------------------------------------------------------
# Parameters: deterministic synthetic init at the torch shapes, then packed
# and zero-padded to TPU-friendly (multiple-of-128) lane widths.
# ---------------------------------------------------------------------------
def init_params(key, num_features_xd=84):
    keys = iter(jax.random.split(key, 64))

    def mat(shape, scale=0.05):
        return scale * jax.random.normal(next(keys), shape, dtype=F32)

    nf = num_features_xd
    I = H = 100
    return {
        "gru": {  # per-direction, per-gate (r, z, n) weights stored [in, out]
            "wih_f": mat((3, I, H)), "whh_f": mat((3, H, H)),
            "bih_f": mat((3, H)),    "bhh_f": mat((3, H)),
            "wih_b": mat((3, I, H)), "whh_b": mat((3, H, H)),
            "bih_b": mat((3, H)),    "bhh_b": mat((3, H)),
        },
        "fc":  {"w1": mat((2 * H, 512)), "b1": mat((512,)),
                "w2": mat((512, 256)),   "b2": mat((256,))},
        "lin": {"w1": mat((2 * H, 512)), "b1": mat((512,)),
                "w2": mat((512, 256)),   "b2": mat((256,))},
        "g1":  {"w": mat((nf, nf)),      "b": mat((nf,))},
        "g2":  {"w": mat((nf, nf * 10)), "b": mat((nf * 10,))},
        "fc_g": {"w1": mat((nf * 10 * 2, 1024)), "b1": mat((1024,)),
                 "w2": mat((1024, 512)),         "b2": mat((512,))},
        "fc_final": {"w1": mat((768, 256)), "b1": mat((256,)),
                     "w2": mat((256, 1)),   "b2": mat((1,))},
    }


def _pad_axis(a, target, axis):
    pad = target - a.shape[axis]
    if pad <= 0:
        return a
    widths = [(0, 0)] * a.ndim
    widths[axis] = (0, pad)
    return jnp.pad(a, widths)


def _pad_rows_two_halves(w, real_half, padded_half):
    """Pad the input-feature axis of a weight whose input is a concat of two
    real_half-wide halves, each half zero-padded to padded_half."""
    top = _pad_axis(w[:real_half], padded_half, 0)
    bot = _pad_axis(w[real_half:], padded_half, 0)
    return jnp.concatenate([top, bot], axis=0)


def prepare_params(p, num_features_xd=84):
    nf = num_features_xd
    I = H = 100
    IP = _round_up(I, 128)
    HP = _round_up(H, 128)
    NFP = _round_up(nf, 128)
    G2P = _round_up(nf * 10, 128)

    def pack_gru(wih, whh, bih, bhh):
        # (3, in, H) -> (in_p, 3*HP), gate order [r | z | n]; pads are zero so
        # padded hidden units stay exactly 0 through the recurrence.
        wih_p = jnp.concatenate(
            [_pad_axis(_pad_axis(wih[g], HP, 1), IP, 0) for g in range(3)], axis=1)
        whh_p = jnp.concatenate(
            [_pad_axis(_pad_axis(whh[g], HP, 1), HP, 0) for g in range(3)], axis=1)
        bih_p = jnp.concatenate([_pad_axis(bih[g], HP, 0) for g in range(3)])
        bhh_p = jnp.concatenate([_pad_axis(bhh[g], HP, 0) for g in range(3)])
        return wih_p, whh_p, bih_p.reshape(1, 3 * HP), bhh_p.reshape(1, 3 * HP)

    g = p["gru"]
    wih_f, whh_f, bih_f, bhh_f = pack_gru(g["wih_f"], g["whh_f"], g["bih_f"], g["bhh_f"])
    wih_b, whh_b, bih_b, bhh_b = pack_gru(g["wih_b"], g["whh_b"], g["bih_b"], g["bhh_b"])

    return {
        "dims": dict(I=I, H=H, IP=IP, HP=HP, NF=nf, NFP=NFP, G2=nf * 10, G2P=G2P),
        "gru": {
            # both directions' input projections fused into one matmul
            "w_in": jnp.concatenate([wih_f, wih_b], axis=1),               # (IP, 6*HP)
            "b_in": jnp.concatenate([bih_f, bih_b], axis=1).reshape(-1),   # (6*HP,)
            "whh_f": whh_f, "bhh_f": bhh_f,
            "whh_b": whh_b, "bhh_b": bhh_b,
        },
        "fc":  {"w1": _pad_rows_two_halves(p["fc"]["w1"], H, HP),
                "b1": p["fc"]["b1"], "w2": p["fc"]["w2"], "b2": p["fc"]["b2"]},
        "lin": {"w1": _pad_rows_two_halves(p["lin"]["w1"], H, HP),
                "b1": p["lin"]["b1"], "w2": p["lin"]["w2"], "b2": p["lin"]["b2"]},
        "g1":  {"w": _pad_axis(_pad_axis(p["g1"]["w"], NFP, 1), NFP, 0),
                "b": _pad_axis(p["g1"]["b"], NFP, 0)},
        "g2":  {"w": _pad_axis(_pad_axis(p["g2"]["w"], G2P, 1), NFP, 0),
                "b": _pad_axis(p["g2"]["b"], G2P, 0)},
        "fc_g": {"w1": _pad_rows_two_halves(p["fc_g"]["w1"], nf * 10, G2P),
                 "b1": p["fc_g"]["b1"],
                 "w2": p["fc_g"]["w2"], "b2": p["fc_g"]["b2"]},
        "fc_final": {"w1": p["fc_final"]["w1"], "b1": p["fc_final"]["b1"],
                     # pad the final 1-wide output to a full 128-lane tile so the
                     # store is lane-dense; sliced back to width 1 outside.
                     "w2": _pad_axis(p["fc_final"]["w2"], 128, 1),
                     "b2": _pad_axis(p["fc_final"]["b2"], 128, 0)},
    }


# ---------------------------------------------------------------------------
# Full forward pass
# ---------------------------------------------------------------------------
def cmms_gcl_forward(params, x, edge_index, batch, smi_em, num_graphs,
                     aug_ratio=0.4, aug_key=None):
    d = params["dims"]
    IP, HP, NFP = d["IP"], d["HP"], d["NFP"]

    # -------- SMILES / sequence branch --------
    smi = smi_em.reshape(-1, 100, 100).astype(F32)             # (T, B=100, 100)
    T, B, _ = smi.shape
    smi_p = _pad_axis(smi, IP, 2)                              # (T, B, IP)

    g = params["gru"]
    # Hoisted input projection for BOTH directions: (T*B, IP) @ (IP, 6*HP)
    gi_all = linear1(smi_p.reshape(T * B, IP), g["w_in"], g["b_in"])
    gi_f = gi_all[:, :3 * HP].reshape(T, B, 3 * HP)
    gi_b = gi_all[:, 3 * HP:].reshape(T, B, 3 * HP)

    h_f, h_b = bigru(gi_f, gi_b, g["whh_f"], g["bhh_f"], g["whh_b"], g["bhh_b"], HP)
    rnn = jnp.concatenate([h_f, h_b], axis=-1)                 # (T, B, 2*HP); ReLU fused

    # fc chain + softmax attention pooling fused (one grid step per sequence)
    pooled = seq_head(rnn, params["fc"]["w1"], params["fc"]["b1"],
                      params["fc"]["w2"], params["fc"]["b2"])  # (T, 2*HP)
    # self.linear: two Linears with no activation in between, fused
    smi_vec = linear2(pooled, params["lin"]["w1"], params["lin"]["b1"],
                      params["lin"]["w2"], params["lin"]["b2"])  # (T, 256)

    # -------- graph branch --------
    Nn = x.shape[0]
    x_f = _pad_axis(x.astype(F32), NFP, 1)                      # (Nn, NFP)
    adj = jnp.zeros((Nn, Nn), F32).at[edge_index[1], edge_index[0]].add(1.0)
    member = (batch[None, :] == jnp.arange(num_graphs)[:, None]).astype(F32)
    counts = jnp.sum(member, axis=1, keepdims=True)
    inv_counts = 1.0 / counts

    # Subgraph augmentation: zero the features of dropped nodes, keep ~aug_ratio*N.
    # TODO(synk): Subgraph()'s randomized k-hop-subgraph walk is replaced by a
    # deterministic random keep-set of the same size; the torch forward reuses
    # the ORIGINAL edge_index/batch downstream, so zeroing node features is the
    # only effect of Subgraph that reaches the output.
    sub_num = max(int(Nn * aug_ratio), 1)
    perm = jax.random.permutation(aug_key, Nn)
    keep_mask = jnp.zeros((Nn,), bool).at[perm[:sub_num]].set(True)
    y_f = jnp.where(keep_mask[:, None], x_f, 0.0)

    # Both graph embeddings (original + augmented) through one fused kernel.
    x_stack = jnp.stack([x_f, y_f], axis=0)                     # (2, Nn, NFP)
    pooled_g = graph_embed_pool(x_stack, adj,
                                params["g1"]["w"], params["g1"]["b"],
                                params["g2"]["w"], params["g2"]["b"],
                                member, inv_counts)             # (2, G, 2*G2P)
    G = num_graphs
    pooled_flat = pooled_g.reshape(2 * G, pooled_g.shape[-1])
    # fc_g chain fused (Dropout is eval-mode identity), both variants batched
    gvec = linear2(pooled_flat, params["fc_g"]["w1"], params["fc_g"]["b1"],
                   params["fc_g"]["w2"], params["fc_g"]["b2"], act1="relu")
    x_g = gvec[:G]                                              # (G, 512)
    y_g = gvec[G:]                                              # (G, 512)

    # -------- head --------
    z_in = jnp.concatenate([x_g, smi_vec], axis=1)              # (G, 768)
    z = linear2(z_in, params["fc_final"]["w1"], params["fc_final"]["b1"],
                params["fc_final"]["w2"], params["fc_final"]["b2"],
                act1="relu")                                    # (G, 128) lane-dense
    z = z[:, :1]                                                # real output width 1
    return z, x_g, y_g


# ---------------------------------------------------------------------------
if __name__ == "__main__":
    key = jax.random.PRNGKey(0)
    k_par, k_smi, k_x, k_aug = jax.random.split(key, 4)
    params = prepare_params(init_params(k_par))

    num_graphs = 2
    nodes_per_graph = 8
    Nn = num_graphs * nodes_per_graph
    nf = 84

    x = jax.random.normal(k_x, (Nn, nf), dtype=F32)
    batch = jnp.repeat(jnp.arange(num_graphs), nodes_per_graph)

    # bidirectional chain graph inside each of the 2 graphs
    src, dst = [], []
    for gidx in range(num_graphs):
        off = gidx * nodes_per_graph
        for i in range(nodes_per_graph - 1):
            src += [off + i, off + i + 1]
            dst += [off + i + 1, off + i]
    edge_index = jnp.array([src, dst], dtype=jnp.int32)          # (2, 28)

    smi_em = jax.random.normal(k_smi, (num_graphs, 100, 100), dtype=F32)

    z, x_g, y_g = cmms_gcl_forward(params, x, edge_index, batch, smi_em,
                                   num_graphs, aug_ratio=0.4, aug_key=k_aug)
    jax.block_until_ready((z, x_g, y_g))
    assert z.shape == (num_graphs, 1)
    assert x_g.shape == (num_graphs, 512)
    assert y_g.shape == (num_graphs, 512)
    print("KERNEL_OK")
</pallas_src>

<mosaic_0001>
module attributes {stable_mosaic.version = 11 : i64} {
  func.func @_linear1_kernel(%arg0: i32, %arg1: memref<200x128xf32, #tpu.memory_space<vmem>>, %arg2: memref<128x768xf32, #tpu.memory_space<vmem>>, %arg3: memref<1x768xf32, #tpu.memory_space<vmem>>, %arg4: memref<200x768xf32, #tpu.memory_space<vmem>>) attributes {dimension_semantics = [#tpu.dimension_semantics<arbitrary>], iteration_bounds = array<i64: 1>, scalar_prefetch = 0 : i64, scratch_operands = 0 : i64, tpu.core_type = #tpu.core_type<tc>, window_params = [{pipeline_mode = #tpu.pipeline_mode<synchronous>, transform_indices = @transform_0, window_bounds = array<i64: 200, 128>}, {pipeline_mode = #tpu.pipeline_mode<synchronous>, transform_indices = @transform_1, window_bounds = array<i64: 128, 768>}, {pipeline_mode = #tpu.pipeline_mode<synchronous>, transform_indices = @transform_2, window_bounds = array<i64: 1, 768>}, {pipeline_mode = #tpu.pipeline_mode<synchronous>, transform_indices = @transform_3, window_bounds = array<i64: 200, 768>}]} {
    %c0 = arith.constant 0 : index
    %c0_0 = arith.constant 0 : index
    %0 = vector.load %arg1[%c0, %c0_0] : memref<200x128xf32, #tpu.memory_space<vmem>>, vector<200x128xf32>
    %c0_1 = arith.constant 0 : index
    %c0_2 = arith.constant 0 : index
    %1 = vector.load %arg2[%c0_1, %c0_2] : memref<128x768xf32, #tpu.memory_space<vmem>>, vector<128x768xf32>
    %cst = arith.constant dense<0.000000e+00> : vector<200x768xf32>
    %2 = tpu.matmul %0, %1, %cst {dimension_numbers = #tpu.dot_dimension_numbers<[1], [0], [0], [1], [0, 0, 1, 1], [], []>} : vector<200x128xf32>, vector<128x768xf32>, vector<200x768xf32> -> vector<200x768xf32>
    %c0_3 = arith.constant 0 : index
    %c0_4 = arith.constant 0 : index
    %3 = vector.load %arg3[%c0_3, %c0_4] : memref<1x768xf32, #tpu.memory_space<vmem>>, vector<1x768xf32>
    %4 = vector.broadcast %3 : vector<1x768xf32> to vector<200x768xf32>
    %5 = arith.addf %2, %4 : vector<200x768xf32>
    %c0_5 = arith.constant 0 : index
    %c0_6 = arith.constant 0 : index
    %6 = vector.load %arg4[%c0_5, %c0_6] : memref<200x768xf32, #tpu.memory_space<vmem>>, vector<200x768xf32>
    tpu.vector_store %arg4[%c0_5, %c0_6], %5 {strides = array<i32>} : memref<200x768xf32, #tpu.memory_space<vmem>>, vector<200x768xf32>,
    return
  }
  func.func @transform_0(%arg0: i32) -> (i32, i32) {
    %c0_i32 = arith.constant 0 : i32
    %c0_i32_0 = arith.constant 0 : i32
    %c0_i32_1 = arith.constant 0 : i32
    return %c0_i32, %c0_i32_0 : i32, i32
  }
  func.func @transform_1(%arg0: i32) -> (i32, i32) {
    %c0_i32 = arith.constant 0 : i32
    %c0_i32_0 = arith.constant 0 : i32
    %c0_i32_1 = arith.constant 0 : i32
    return %c0_i32, %c0_i32_0 : i32, i32
  }
  func.func @transform_2(%arg0: i32) -> (i32, i32) {
    %c0_i32 = arith.constant 0 : i32
    %c0_i32_0 = arith.constant 0 : i32
    %c0_i32_1 = arith.constant 0 : i32
    return %c0_i32, %c0_i32_0 : i32, i32
  }
  func.func @transform_3(%arg0: i32) -> (i32, i32) {
    %c0_i32 = arith.constant 0 : i32
    %c0_i32_0 = arith.constant 0 : i32
    %c0_i32_1 = arith.constant 0 : i32
    return %c0_i32, %c0_i32_0 : i32, i32
  }
}

</mosaic_0001>

<llo_original>
// kernel: tpu_custom_call.1
$region0: #{tpu_custom_call.1}
  #allocation0 [shape = 'u32[]', space=smem, size = 0x4, offset = 0x4, fixed_abs, tag = 'smem constant byte address 0x4 - core index']
  #allocation1 [shape = 'u32[144,128]{1,0:T(1,128)}', space=vmem, size = 0x12000, scoped, tag = 'internal scratch']
  %s0 = inlined_call_operand.hbm [shape: f32[200,128], index: 0, kind: input, shape index: {}]
  %s1 = inlined_call_operand.hbm [shape: f32[128,768], index: 1, kind: input, shape index: {}]
  %s2 = inlined_call_operand.vmem [shape: f32[1,768], index: 2, kind: input, shape index: {}]
  %s3 = inlined_call_operand.hbm [shape: f32[200,768], index: 3, kind: output, shape index: {}]
  %s4 = sld [smem:[#allocation0]]
  $region30: #{tpu_custom_call.1} parent=0
    _
  %s6 = ssub.s32 1, %s4
  %s7 = scalar_select 0, %s6, %s4
  $region1: #{tpu_custom_call.1} parent=0
    #allocation2 [shape = 'u8[102400]{0}', space=vmem, size = 0x19000, scoped, tag = 'input window, operand 0, single buffered']
    #allocation3 [shape = 's32[1]{0}', space=sflag, size = 0x4, scoped, tag = 'scoped memory for tpu_custom_call.1']
    #allocation4 [shape = 's32[1]{0}', space=sflag, size = 0x4, scoped, tag = 'scoped memory for tpu_custom_call.1']
    #allocation5 [shape = 'u8[393216]{0}', space=vmem, size = 0x60000, scoped, tag = 'input window, operand 1, single buffered']
    #allocation6 [shape = 's32[1]{0}', space=sflag, size = 0x4, scoped, tag = 'scoped memory for tpu_custom_call.1']
    #allocation7 [shape = 'u8[614400]{0}', space=vmem, size = 0x96000, scoped, tag = 'output window, operand 0, single buffered']
    %8 = vsyncpa [#allocation3], 0
    %9 = vsyncpa [#allocation6], 0
    %10 = vsyncpa [#allocation4], 0
    // Predicated region
    $region2: #{tpu_custom_call.1} parent=1 // pred_check
      _
    $region3: #{tpu_custom_call.1} parent=1 // pred_check_branch
      %12 = sbr.rel (0) target = $region5
    $region4: #{tpu_custom_call.1} parent=1 // pred_region
      %s14 = ssub.s32 3200, 3200
      %15 = vsyncadd [#allocation3], %s14
      %s16 = sshll.u32 [#allocation2], 4
      %s17 = int_to_ptr.vmem [resolvable:$true] %s16
      %22 = dma.hbm_to_vmem [thread:$0]  %s0, 3200, %s17, [#allocation3], 128, 128, 8
    $region5: #{tpu_custom_call.1} parent=1 // pred_fallthru
      _
    // Predicated region
    $region6: #{tpu_custom_call.1} parent=1 // pred_check
      _
    $region7: #{tpu_custom_call.1} parent=1 // pred_check_branch
      %24 = sbr.rel (0) target = $region9
    $region8: #{tpu_custom_call.1} parent=1 // pred_region
      %s26 = ssub.s32 12288, 12288
      %27 = vsyncadd [#allocation6], %s26
      %s28 = sshll.u32 [#allocation5], 4
      %s29 = int_to_ptr.vmem [resolvable:$true] %s28
      %34 = dma.hbm_to_vmem [thread:$0]  %s1, 12288, %s29, [#allocation6], 768, 768, 48
    $region9: #{tpu_custom_call.1} parent=1 // pred_fallthru
      _
    // Predicated region
    $region10: #{tpu_custom_call.1} parent=1 // pred_check
      _
    $region11: #{tpu_custom_call.1} parent=1 // pred_check_branch
      %36 = sbr.rel (0) target = $region13
    $region12: #{tpu_custom_call.1} parent=1 // pred_region
      _
    $region13: #{tpu_custom_call.1} parent=1 // pred_fallthru
      _
    // Predicated region
    $region14: #{tpu_custom_call.1} parent=1 // pred_check
      _
    $region15: #{tpu_custom_call.1} parent=1 // pred_check_branch
      %38 = sbr.rel (0) target = $region17
    $region16: #{tpu_custom_call.1} parent=1 // pred_region
      %39 = dma.done [#allocation3], 3200
    $region17: #{tpu_custom_call.1} parent=1 // pred_fallthru
      _
    // Predicated region
    $region18: #{tpu_custom_call.1} parent=1 // pred_check
      _
    $region19: #{tpu_custom_call.1} parent=1 // pred_check_branch
      %41 = sbr.rel (0) target = $region21
    $region20: #{tpu_custom_call.1} parent=1 // pred_region
      %42 = dma.done [#allocation6], 12288
    $region21: #{tpu_custom_call.1} parent=1 // pred_fallthru
      _
    %v43 = vld [vmem:[#allocation2] sm:$0xff]
    %v44 = vld [vmem:[#allocation2 + $0x8] sm:$0xff]
    %v45 = vld [vmem:[#allocation2 + $0x10] sm:$0xff]
    %v46 = vld [vmem:[#allocation2 + $0x18] sm:$0xff]
    %v47 = vld [vmem:[#allocation2 + $0x20] sm:$0xff]
    %v48 = vld [vmem:[#allocation2 + $0x28] sm:$0xff]
    %v49 = vld [vmem:[#allocation2 + $0x30] sm:$0xff]
    %v50 = vld [vmem:[#allocation2 + $0x38] sm:$0xff]
    %v51 = vld [vmem:[#allocation2 + $0x40] sm:$0xff]
    %v52 = vld [vmem:[#allocation2 + $0x48] sm:$0xff]
    %v53 = vld [vmem:[#allocation2 + $0x50] sm:$0xff]
    %v54 = vld [vmem:[#allocation2 + $0x58] sm:$0xff]
    %v55 = vld [vmem:[#allocation2 + $0x60] sm:$0xff]
    %v56 = vld [vmem:[#allocation2 + $0x68] sm:$0xff]
    %v57 = vld [vmem:[#allocation2 + $0x70] sm:$0xff]
    %v58 = vld [vmem:[#allocation2 + $0x78] sm:$0xff]
    %v59 = vld [vmem:[#allocation2 + $0x80] sm:$0xff]
    %v60 = vld [vmem:[#allocation2 + $0x88] sm:$0xff]
    %v61 = vld [vmem:[#allocation2 + $0x90] sm:$0xff]
    %v62 = vld [vmem:[#allocation2 + $0x98] sm:$0xff]
    %v63 = vld [vmem:[#allocation2 + $0xa0] sm:$0xff]
    %v64 = vld [vmem:[#allocation2 + $0xa8] sm:$0xff]
    %v65 = vld [vmem:[#allocation2 + $0xb0] sm:$0xff]
    %v66 = vld [vmem:[#allocation2 + $0xb8] sm:$0xff]
    %v67 = vld [vmem:[#allocation2 + $0xc0] sm:$0xff]
    %v68 = vld [vmem:[#allocation5] sm:$0xff]
    %v69 = vld [vmem:[#allocation5 + $0x8] sm:$0xff]
    %v70 = vld [vmem:[#allocation5 + $0x10] sm:$0xff]
    %v71 = vld [vmem:[#allocation5 + $0x18] sm:$0xff]
    %v72 = vld [vmem:[#allocation5 + $0x20] sm:$0xff]
    %v73 = vld [vmem:[#allocation5 + $0x28] sm:$0xff]
    %v74 = vld [vmem:[#allocation5 + $0x30] sm:$0xff]
    %v75 = vld [vmem:[#allocation5 + $0x38] sm:$0xff]
    %v76 = vld [vmem:[#allocation5 + $0x40] sm:$0xff]
    %v77 = vld [vmem:[#allocation5 + $0x48] sm:$0xff]
    %v78 = vld [vmem:[#allocation5 + $0x50] sm:$0xff]
    %v79 = vld [vmem:[#allocation5 + $0x58] sm:$0xff]
    %v80 = vld [vmem:[#allocation5 + $0x60] sm:$0xff]
    %v81 = vld [vmem:[#allocation5 + $0x68] sm:$0xff]
    %v82 = vld [vmem:[#allocation5 + $0x70] sm:$0xff]
    %v83 = vld [vmem:[#allocation5 + $0x78] sm:$0xff]
    %v84 = vld [vmem:[#allocation5 + $0x80] sm:$0xff]
    %v85 = vld [vmem:[#allocation5 + $0x88] sm:$0xff]
    %v86 = vld [vmem:[#allocation5 + $0x90] sm:$0xff]
    %v87 = vld [vmem:[#allocation5 + $0x98] sm:$0xff]
    %v88 = vld [vmem:[#allocation5 + $0xa0] sm:$0xff]
    %v89 = vld [vmem:[#allocation5 + $0xa8] sm:$0xff]
    %v90 = vld [vmem:[#allocation5 + $0xb0] sm:$0xff]
    %v91 = vld [vmem:[#allocation5 + $0xb8] sm:$0xff]
    %v92 = vld [vmem:[#allocation5 + $0xc0] sm:$0xff]
    %v93 = vld [vmem:[#allocation5 + $0xc8] sm:$0xff]
    %v94 = vld [vmem:[#allocation5 + $0xd0] sm:$0xff]
    %v95 = vld [vmem:[#allocation5 + $0xd8] sm:$0xff]
    %v96 = vld [vmem:[#allocation5 + $0xe0] sm:$0xff]
    %v97 = vld [vmem:[#allocation5 + $0xe8] sm:$0xff]
    %v98 = vld [vmem:[#allocation5 + $0xf0] sm:$0xff]
    %v99 = vld [vmem:[#allocation5 + $0xf8] sm:$0xff]
    %v100 = vld [vmem:[#allocation5 + $0x100] sm:$0xff]
    %v101 = vld [vmem:[#allocation5 + $0x108] sm:$0xff]
    %v102 = vld [vmem:[#allocation5 + $0x110] sm:$0xff]
    %v103 = vld [vmem:[#allocation5 + $0x118] sm:$0xff]
    %v104 = vld [vmem:[#allocation5 + $0x120] sm:$0xff]
    %v105 = vld [vmem:[#allocation5 + $0x128] sm:$0xff]
    %v106 = vld [vmem:[#allocation5 + $0x130] sm:$0xff]
    %v107 = vld [vmem:[#allocation5 + $0x138] sm:$0xff]
    %v108 = vld [vmem:[#allocation5 + $0x140] sm:$0xff]
    %v109 = vld [vmem:[#allocation5 + $0x148] sm:$0xff]
    %v110 = vld [vmem:[#allocation5 + $0x150] sm:$0xff]
    %v111 = vld [vmem:[#allocation5 + $0x158] sm:$0xff]
    %v112 = vld [vmem:[#allocation5 + $0x160] sm:$0xff]
    %v113 = vld [vmem:[#allocation5 + $0x168] sm:$0xff]
    %v114 = vld [vmem:[#allocation5 + $0x170] sm:$0xff]
    %v115 = vld [vmem:[#allocation5 + $0x178] sm:$0xff]
    %v116 = vld [vmem:[#allocation5 + $0x180] sm:$0xff]
    %v117 = vld [vmem:[#allocation5 + $0x188] sm:$0xff]
    %v118 = vld [vmem:[#allocation5 + $0x190] sm:$0xff]
    %v119 = vld [vmem:[#allocation5 + $0x198] sm:$0xff]
    %v120 = vld [vmem:[#allocation5 + $0x1a0] sm:$0xff]
    %v121 = vld [vmem:[#allocation5 + $0x1a8] sm:$0xff]
    %v122 = vld [vmem:[#allocation5 + $0x1b0] sm:$0xff]
    %v123 = vld [vmem:[#allocation5 + $0x1b8] sm:$0xff]
    %v124 = vld [vmem:[#allocation5 + $0x1c0] sm:$0xff]
    %v125 = vld [vmem:[#allocation5 + $0x1c8] sm:$0xff]
    %v126 = vld [vmem:[#allocation5 + $0x1d0] sm:$0xff]
    %v127 = vld [vmem:[#allocation5 + $0x1d8] sm:$0xff]
    %v128 = vld [vmem:[#allocation5 + $0x1e0] sm:$0xff]
    %v129 = vld [vmem:[#allocation5 + $0x1e8] sm:$0xff]
    %v130 = vld [vmem:[#allocation5 + $0x1f0] sm:$0xff]
    %v131 = vld [vmem:[#allocation5 + $0x1f8] sm:$0xff]
    %v132 = vld [vmem:[#allocation5 + $0x200] sm:$0xff]
    %v133 = vld [vmem:[#allocation5 + $0x208] sm:$0xff]
    %v134 = vld [vmem:[#allocation5 + $0x210] sm:$0xff]
    %v135 = vld [vmem:[#allocation5 + $0x218] sm:$0xff]
    %v136 = vld [vmem:[#allocation5 + $0x220] sm:$0xff]
    %v137 = vld [vmem:[#allocation5 + $0x228] sm:$0xff]
    %v138 = vld [vmem:[#allocation5 + $0x230] sm:$0xff]
    %v139 = vld [vmem:[#allocation5 + $0x238] sm:$0xff]
    %v140 = vld [vmem:[#allocation5 + $0x240] sm:$0xff]
    %v141 = vld [vmem:[#allocation5 + $0x248] sm:$0xff]
    %v142 = vld [vmem:[#allocation5 + $0x250] sm:$0xff]
    %v143 = vld [vmem:[#allocation5 + $0x258] sm:$0xff]
    %v144 = vld [vmem:[#allocation5 + $0x260] sm:$0xff]
    %v145 = vld [vmem:[#allocation5 + $0x268] sm:$0xff]
    %v146 = vld [vmem:[#allocation5 + $0x270] sm:$0xff]
    %v147 = vld [vmem:[#allocation5 + $0x278] sm:$0xff]
    %v148 = vld [vmem:[#allocation5 + $0x280] sm:$0xff]
    %v149 = vld [vmem:[#allocation5 + $0x288] sm:$0xff]
    %v150 = vld [vmem:[#allocation5 + $0x290] sm:$0xff]
    %v151 = vld [vmem:[#allocation5 + $0x298] sm:$0xff]
    %v152 = vld [vmem:[#allocation5 + $0x2a0] sm:$0xff]
    %v153 = vld [vmem:[#allocation5 + $0x2a8] sm:$0xff]
    %v154 = vld [vmem:[#allocation5 + $0x2b0] sm:$0xff]
    %v155 = vld [vmem:[#allocation5 + $0x2b8] sm:$0xff]
    %v156 = vld [vmem:[#allocation5 + $0x2c0] sm:$0xff]
    %v157 = vld [vmem:[#allocation5 + $0x2c8] sm:$0xff]
    %v158 = vld [vmem:[#allocation5 + $0x2d0] sm:$0xff]
    %v159 = vld [vmem:[#allocation5 + $0x2d8] sm:$0xff]
    %v160 = vld [vmem:[#allocation5 + $0x2e0] sm:$0xff]
    %v161 = vld [vmem:[#allocation5 + $0x2e8] sm:$0xff]
    %v162 = vld [vmem:[#allocation5 + $0x2f0] sm:$0xff]
    %v163 = vld [vmem:[#allocation5 + $0x2f8] sm:$0xff]
    %v164 = vld [vmem:[%s2] sm:$0x3f]
    %v166 = vlaneseq
    %v167 = vshrl.u32 %v166, 7
    %v168 = vsub.s32 0, %v167
    %v169 = vrot.slane %v164, %v168
    %v170 = vlaneseq
    %v171 = vshrl.u32 %v170, 7
    %v172 = vsub.s32 1, %v171
    %v173 = vrot.slane %v164, %v172
    %v174 = vlaneseq
    %v175 = vshrl.u32 %v174, 7
    %v176 = vsub.s32 2, %v175
    %v177 = vrot.slane %v164, %v176
    %v178 = vlaneseq
    %v179 = vshrl.u32 %v178, 7
    %v180 = vsub.s32 3, %v179
    %v181 = vrot.slane %v164, %v180
    %v182 = vlaneseq
    %v183 = vshrl.u32 %v182, 7
    %v184 = vsub.s32 4, %v183
    %v185 = vrot.slane %v164, %v184
    %v186 = vlaneseq
    %v187 = vshrl.u32 %v186, 7
    %v188 = vsub.s32 5, %v187
    %v189 = vrot.slane %v164, %v188
    %196 = vmatprep.subr.mxu0 %v69
    %197 = vmatpush1.msra.mxu0 %v68
    %198 = vmatprep.subr.mxu0 %v75
    %199 = vmatpush1.msra.mxu0 %v74
    %200 = vmatprep.subr.mxu0 %v81
    %201 = vmatpush1.msra.mxu0 %v80
    %202 = vmatprep.subr.mxu0 %v87
    %203 = vmatpush1.msra.mxu0 %v86
    %204 = vmatprep.subr.mxu0 %v93
    %205 = vmatpush1.msra.mxu0 %v92
    %206 = vmatprep.subr.mxu0 %v99
    %207 = vmatpush1.msra.mxu0 %v98
    %208 = vmatprep.subr.mxu0 %v105
    %209 = vmatpush1.msra.mxu0 %v104
    %210 = vmatprep.subr.mxu0 %v111
    %211 = vmatpush1.msra.mxu0 %v110
    %212 = vmatprep.subr.mxu0 %v117
    %213 = vmatpush1.msra.mxu0 %v116
    %214 = vmatprep.subr.mxu0 %v123
    %215 = vmatpush1.msra.mxu0 %v122
    %216 = vmatprep.subr.mxu0 %v129
    %217 = vmatpush1.msra.mxu0 %v128
    %218 = vmatprep.subr.mxu0 %v135
    %219 = vmatpush1.msra.mxu0 %v134
    %220 = vmatprep.subr.mxu0 %v141
    %221 = vmatpush1.msra.mxu0 %v140
    %222 = vmatprep.subr.mxu0 %v147
    %223 = vmatpush1.msra.mxu0 %v146
    %224 = vmatprep.subr.mxu0 %v153
    %225 = vmatpush1.msra.mxu0 %v152
    %226 = vmatprep.subr.mxu0 %v159
    %227 = vmatpush1.msra.mxu0 %v158
    %228 = vmatprep.subr.mxu0 0.0
    %229 = vmatpush1.msra.mxu0 0.0
    %230 = vmatprep.subr.mxu0 0.0
    %231 = vmatpush1.msra.mxu0 0.0
    %232 = vmatprep.subr.mxu0 0.0
    %233 = vmatpush1.msra.mxu0 0.0
    %234 = vmatprep.subr.mxu0 0.0
    %235 = vmatpush1.msra.mxu0 0.0
    %236 = vmatprep.subr.mxu0 0.0
    %237 = vmatpush1.msra.mxu0 0.0
    %238 = vmatprep.subr.mxu0 0.0
    %239 = vmatpush1.msra.mxu0 0.0
    %240 = vmatprep.subr.mxu0 0.0
    %241 = vmatpush1.msra.mxu0 0.0
    %242 = vmatprep.subr.mxu0 0.0
    %243 = vmatpush1.msra.mxu0 0.0
    %244 = vmatprep.subr.mxu0 0.0
    %245 = vmatpush1.msra.mxu0 0.0
    %246 = vmatprep.subr.mxu0 0.0
    %247 = vmatpush1.msra.mxu0 0.0
    %248 = vmatprep.subr.mxu0 0.0
    %249 = vmatpush1.msra.mxu0 0.0
    %250 = vmatprep.subr.mxu0 0.0
    %251 = vmatpush1.msra.mxu0 0.0
    %252 = vmatprep.subr.mxu0 0.0
    %253 = vmatpush1.msra.mxu0 0.0
    %254 = vmatprep.subr.mxu0 0.0
    %255 = vmatpush1.msra.mxu0 0.0
    %256 = vmatprep.subr.mxu0 0.0
    %257 = vmatpush1.msra.mxu0 0.0
    %258 = vmatprep.subr.mxu0 0.0
    %259 = vmatpush1.msra.mxu0 0.0
    %260 = vmatprep.mubr.f32.mxu0 0.0
    %261 = vmatmul.mubr.f32.gmra.mrb[0].mxu0 %v43
    %v262 = vpop.f32.mrb[0].mxu0
    %v263 = vadd.f32 %v169, %v262
    %v264 = vpop.f32.mrb[0].mxu0
    %v265 = vadd.f32 %v173, %v264
    %266 = vmatprep.mubr.f32.mxu0 0.0
    %267 = vmatmul.mubr.f32.gmra.mrb[0].mxu0 %v44
    %v268 = vpop.f32.mrb[0].mxu0
    %v269 = vadd.f32 %v169, %v268
    %v270 = vpop.f32.mrb[0].mxu0
    %v271 = vadd.f32 %v173, %v270
    %272 = vmatprep.mubr.f32.mxu0 0.0
    %273 = vmatmul.mubr.f32.gmra.mrb[0].mxu0 %v45
    %v274 = vpop.f32.mrb[0].mxu0
    %v275 = vadd.f32 %v169, %v274
    %v276 = vpop.f32.mrb[0].mxu0
    %v277 = vadd.f32 %v173, %v276
    %278 = vmatprep.mubr.f32.mxu0 0.0
    %279 = vmatmul.mubr.f32.gmra.mrb[0].mxu0 %v46
    %v280 = vpop.f32.mrb[0].mxu0
    %v281 = vadd.f32 %v169, %v280
    %v282 = vpop.f32.mrb[0].mxu0
    %v283 = vadd.f32 %v173, %v282
    %284 = vmatprep.mubr.f32.mxu0 0.0
    %285 = vmatmul.mubr.f32.gmra.mrb[0].mxu0 %v47
    %v286 = vpop.f32.mrb[0].mxu0
    %v287 = vadd.f32 %v169, %v286
    %v288 = vpop.f32.mrb[0].mxu0
    %v289 = vadd.f32 %v173, %v288
    %290 = vmatprep.mubr.f32.mxu0 0.0
    %291 = vmatmul.mubr.f32.gmra.mrb[0].mxu0 %v48
    %v292 = vpop.f32.mrb[0].mxu0
    %v293 = vadd.f32 %v169, %v292
    %v294 = vpop.f32.mrb[0].mxu0
    %v295 = vadd.f32 %v173, %v294
    %296 = vmatprep.mubr.f32.mxu0 0.0
    %297 = vmatmul.mubr.f32.gmra.mrb[0].mxu0 %v49
    %v298 = vpop.f32.mrb[0].mxu0
    %v299 = vadd.f32 %v169, %v298
    %v300 = vpop.f32.mrb[0].mxu0
    %v301 = vadd.f32 %v173, %v300
    %302 = vmatprep.mubr.f32.mxu0 0.0
    %303 = vmatmul.mubr.f32.gmra.mrb[0].mxu0 %v50
    %v304 = vpop.f32.mrb[0].mxu0
    %v305 = vadd.f32 %v169, %v304
    %v306 = vpop.f32.mrb[0].mxu0
    %v307 = vadd.f32 %v173, %v306
    %308 = vmatprep.mubr.f32.mxu0 0.0
    %309 = vmatmul.mubr.f32.gmra.mrb[0].mxu0 %v51
    %v310 = vpop.f32.mrb[0].mxu0
    %v311 = vadd.f32 %v169, %v310
    %v312 = vpop.f32.mrb[0].mxu0
    %v313 = vadd.f32 %v173, %v312
    %314 = vmatprep.mubr.f32.mxu0 0.0
    %315 = vmatmul.mubr.f32.gmra.mrb[0].mxu0 %v52
    %v316 = vpop.f32.mrb[0].mxu0
    %v317 = vadd.f32 %v169, %v316
    %v318 = vpop.f32.mrb[0].mxu0
    %v319 = vadd.f32 %v173, %v318
    %320 = vmatprep.mubr.f32.mxu0 0.0
    %321 = vmatmul.mubr.f32.gmra.mrb[0].mxu0 %v53
    %v322 = vpop.f32.mrb[0].mxu0
    %v323 = vadd.f32 %v169, %v322
    %v324 = vpop.f32.mrb[0].mxu0
    %v325 = vadd.f32 %v173, %v324
    %326 = vmatprep.mubr.f32.mxu0 0.0
    %327 = vmatmul.mubr.f32.gmra.mrb[0].mxu0 %v54
    %v328 = vpop.f32.mrb[0].mxu0
    %v329 = vadd.f32 %v169, %v328
    %v330 = vpop.f32.mrb[0].mxu0
    %v331 = vadd.f32 %v173, %v330
    %332 = vmatprep.mubr.f32.mxu0 0.0
    %333 = vmatmul.mubr.f32.gmra.mrb[0].mxu0 %v55
    %v334 = vpop.f32.mrb[0].mxu0
    %v335 = vadd.f32 %v169, %v334
    %v336 = vpop.f32.mrb[0].mxu0
    %v337 = vadd.f32 %v173, %v336
    %338 = vmatprep.mubr.f32.mxu0 0.0
    %339 = vmatmul.mubr.f32.gmra.mrb[0].mxu0 %v56
    %v340 = vpop.f32.mrb[0].mxu0
    %v341 = vadd.f32 %v169, %v340
    %v342 = vpop.f32.mrb[0].mxu0
    %v343 = vadd.f32 %v173, %v342
    %344 = vmatprep.mubr.f32.mxu0 0.0
    %345 = vmatmul.mubr.f32.gmra.mrb[0].mxu0 %v57
    %v346 = vpop.f32.mrb[0].mxu0
    %v347 = vadd.f32 %v169, %v346
    %v348 = vpop.f32.mrb[0].mxu0
    %v349 = vadd.f32 %v173, %v348
    %350 = vmatprep.mubr.f32.mxu0 0.0
    %351 = vmatmul.mubr.f32.gmra.mrb[0].mxu0 %v58
    %v352 = vpop.f32.mrb[0].mxu0
    %v353 = vadd.f32 %v169, %v352
    %v354 = vpop.f32.mrb[0].mxu0
    %v355 = vadd.f32 %v173, %v354
    %356 = vmatprep.mubr.f32.mxu0 0.0
    %357 = vmatmul.mubr.f32.gmra.mrb[0].mxu0 %v59
    %v358 = vpop.f32.mrb[0].mxu0
    %v359 = vadd.f32 %v169, %v358
    %v360 = vpop.f32.mrb[0].mxu0
    %v361 = vadd.f32 %v173, %v360
    %362 = vmatprep.mubr.f32.mxu0 0.0
    %363 = vmatmul.mubr.f32.gmra.mrb[0].mxu0 %v60
    %v364 = vpop.f32.mrb[0].mxu0
    %v365 = vadd.f32 %v169, %v364
    %v366 = vpop.f32.mrb[0].mxu0
    %v367 = vadd.f32 %v173, %v366
    %368 = vmatprep.mubr.f32.mxu0 0.0
    %369 = vmatmul.mubr.f32.gmra.mrb[0].mxu0 %v61
    %v370 = vpop.f32.mrb[0].mxu0
    %v371 = vadd.f32 %v169, %v370
    %v372 = vpop.f32.mrb[0].mxu0
    %v373 = vadd.f32 %v173, %v372
    %374 = vmatprep.mubr.f32.mxu0 0.0
    %375 = vmatmul.mubr.f32.gmra.mrb[0].mxu0 %v62
    %v376 = vpop.f32.mrb[0].mxu0
    %v377 = vadd.f32 %v169, %v376
    %v378 = vpop.f32.mrb[0].mxu0
    %v379 = vadd.f32 %v173, %v378
    %380 = vmatprep.mubr.f32.mxu0 0.0
    %381 = vmatmul.mubr.f32.gmra.mrb[0].mxu0 %v63
    %v382 = vpop.f32.mrb[0].mxu0
    %v383 = vadd.f32 %v169, %v382
    %v384 = vpop.f32.mrb[0].mxu0
    %v385 = vadd.f32 %v173, %v384
    %386 = vmatprep.mubr.f32.mxu0 0.0
    %387 = vmatmul.mubr.f32.gmra.mrb[0].mxu0 %v64
    %v388 = vpop.f32.mrb[0].mxu0
    %v389 = vadd.f32 %v169, %v388
    %v390 = vpop.f32.mrb[0].mxu0
    %v391 = vadd.f32 %v173, %v390
    %392 = vmatprep.mubr.f32.mxu0 0.0
    %393 = vmatmul.mubr.f32.gmra.mrb[0].mxu0 %v65
    %v394 = vpop.f32.mrb[0].mxu0
    %v395 = vadd.f32 %v169, %v394
    %v396 = vpop.f32.mrb[0].mxu0
    %v397 = vadd.f32 %v173, %v396
    %398 = vmatprep.mubr.f32.mxu0 0.0
    %399 = vmatmul.mubr.f32.gmra.mrb[0].mxu0 %v66
    %v400 = vpop.f32.mrb[0].mxu0
    %v401 = vadd.f32 %v169, %v400
    %v402 = vpop.f32.mrb[0].mxu0
    %v403 = vadd.f32 %v173, %v402
    %404 = vmatprep.mubr.f32.mxu0 0.0
    %405 = vmatmul.mubr.f32.gmra.mrb[0].mxu0 %v67
    %v406 = vpop.f32.mrb[0].mxu0
    %v407 = vadd.f32 %v169, %v406
    %v408 = vpop.f32.mrb[0].mxu0
    %v409 = vadd.f32 %v173, %v408
    %410 = vdwg.mxu0
    %411 = vmatprep.subr.mxu0 %v71
    %412 = vmatpush1.msra.mxu0 %v70
    %413 = vmatprep.subr.mxu0 %v77
    %414 = vmatpush1.msra.mxu0 %v76
    %415 = vmatprep.subr.mxu0 %v83
    %416 = vmatpush1.msra.mxu0 %v82
    %417 = vmatprep.subr.mxu0 %v89
    %418 = vmatpush1.msra.mxu0 %v88
    %419 = vmatprep.subr.mxu0 %v95
    %420 = vmatpush1.msra.mxu0 %v94
    %421 = vmatprep.subr.mxu0 %v101
    %422 = vmatpush1.msra.mxu0 %v100
    %423 = vmatprep.subr.mxu0 %v107
    %424 = vmatpush1.msra.mxu0 %v106
    %425 = vmatprep.subr.mxu0 %v113
    %426 = vmatpush1.msra.mxu0 %v112
    %427 = vmatprep.subr.mxu0 %v119
    %428 = vmatpush1.msra.mxu0 %v118
    %429 = vmatprep.subr.mxu0 %v125
    %430 = vmatpush1.msra.mxu0 %v124
    %431 = vmatprep.subr.mxu0 %v131
    %432 = vmatpush1.msra.mxu0 %v130
    %433 = vmatprep.subr.mxu0 %v137
    %434 = vmatpush1.msra.mxu0 %v136
    %435 = vmatprep.subr.mxu0 %v143
    %436 = vmatpush1.msra.mxu0 %v142
    %437 = vmatprep.subr.mxu0 %v149
    %438 = vmatpush1.msra.mxu0 %v148
    %439 = vmatprep.subr.mxu0 %v155
    %440 = vmatpush1.msra.mxu0 %v154
    %441 = vmatprep.subr.mxu0 %v161
    %442 = vmatpush1.msra.mxu0 %v160
    %443 = vmatprep.subr.mxu0 0.0
    %444 = vmatpush1.msra.mxu0 0.0
    %445 = vmatprep.subr.mxu0 0.0
    %446 = vmatpush1.msra.mxu0 0.0
    %447 = vmatprep.subr.mxu0 0.0
    %448 = vmatpush1.msra.mxu0 0.0
    %449 = vmatprep.subr.mxu0 0.0
    %450 = vmatpush1.msra.mxu0 0.0
    %451 = vmatprep.subr.mxu0 0.0
    %452 = vmatpush1.msra.mxu0 0.0
    %453 = vmatprep.subr.mxu0 0.0
    %454 = vmatpush1.msra.mxu0 0.0
    %455 = vmatprep.subr.mxu0 0.0
    %456 = vmatpush1.msra.mxu0 0.0
    %457 = vmatprep.subr.mxu0 0.0
    %458 = vmatpush1.msra.mxu0 0.0
    %459 = vmatprep.subr.mxu0 0.0
    %460 = vmatpush1.msra.mxu0 0.0
    %461 = vmatprep.subr.mxu0 0.0
    %462 = vmatpush1.msra.mxu0 0.0
    %463 = vmatprep.subr.mxu0 0.0
    %464 = vmatpush1.msra.mxu0 0.0
    %465 = vmatprep.subr.mxu0 0.0
    %466 = vmatpush1.msra.mxu0 0.0
    %467 = vmatprep.subr.mxu0 0.0
    %468 = vmatpush1.msra.mxu0 0.0
    %469 = vmatprep.subr.mxu0 0.0
    %470 = vmatpush1.msra.mxu0 0.0
    %471 = vmatprep.subr.mxu0 0.0
    %472 = vmatpush1.msra.mxu0 0.0
    %473 = vmatprep.subr.mxu0 0.0
    %474 = vmatpush1.msra.mxu0 0.0
    %475 = vmatprep.mubr.f32.mxu0 0.0
    %476 = vmatmul.mubr.f32.gmra.mrb[0].mxu0 %v43
    %v477 = vpop.f32.mrb[0].mxu0
    %v478 = vadd.f32 %v177, %v477
    %v479 = vpop.f32.mrb[0].mxu0
    %v480 = vadd.f32 %v181, %v479
    %481 = vmatprep.mubr.f32.mxu0 0.0
    %482 = vmatmul.mubr.f32.gmra.mrb[0].mxu0 %v44
    %v483 = vpop.f32.mrb[0].mxu0
    %v484 = vadd.f32 %v177, %v483
    %v485 = vpop.f32.mrb[0].mxu0
    %v486 = vadd.f32 %v181, %v485
    %487 = vmatprep.mubr.f32.mxu0 0.0
    %488 = vmatmul.mubr.f32.gmra.mrb[0].mxu0 %v45
    %v489 = vpop.f32.mrb[0].mxu0
    %v490 = vadd.f32 %v177, %v489
    %v491 = vpop.f32.mrb[0].mxu0
    %v492 = vadd.f32 %v181, %v491
    %493 = vmatprep.mubr.f32.mxu0 0.0
    %494 = vmatmul.mubr.f32.gmra.mrb[0].mxu0 %v46
    %v495 = vpop.f32.mrb[0].mxu0
    %v496 = vadd.f32 %v177, %v495
    %v497 = vpop.f32.mrb[0].mxu0
    %v498 = vadd.f32 %v181, %v497
    %499 = vmatprep.mubr.f32.mxu0 0.0
    %500 = vmatmul.mubr.f32.gmra.mrb[0].mxu0 %v47
    %v501 = vpop.f32.mrb[0].mxu0
    %v502 = vadd.f32 %v177, %v501
    %v503 = vpop.f32.mrb[0].mxu0
    %v504 = vadd.f32 %v181, %v503
    %505 = vmatprep.mubr.f32.mxu0 0.0
    %506 = vmatmul.mubr.f32.gmra.mrb[0].mxu0 %v48
    %v507 = vpop.f32.mrb[0].mxu0
    %v508 = vadd.f32 %v177, %v507
    %v509 = vpop.f32.mrb[0].mxu0
    %v510 = vadd.f32 %v181, %v509
    %511 = vmatprep.mubr.f32.mxu0 0.0
    %512 = vmatmul.mubr.f32.gmra.mrb[0].mxu0 %v49
    %v513 = vpop.f32.mrb[0].mxu0
    %v514 = vadd.f32 %v177, %v513
    %v515 = vpop.f32.mrb[0].mxu0
    %v516 = vadd.f32 %v181, %v515
    %517 = vmatprep.mubr.f32.mxu0 0.0
    %518 = vmatmul.mubr.f32.gmra.mrb[0].mxu0 %v50
    %v519 = vpop.f32.mrb[0].mxu0
    %v520 = vadd.f32 %v177, %v519
    %v521 = vpop.f32.mrb[0].mxu0
    %v522 = vadd.f32 %v181, %v521
    %523 = vmatprep.mubr.f32.mxu0 0.0
    %524 = vmatmul.mubr.f32.gmra.mrb[0].mxu0 %v51
    %v525 = vpop.f32.mrb[0].mxu0
    %v526 = vadd.f32 %v177, %v525
    %v527 = vpop.f32.mrb[0].mxu0
    %v528 = vadd.f32 %v181, %v527
    %529 = vmatprep.mubr.f32.mxu0 0.0
    %530 = vmatmul.mubr.f32.gmra.mrb[0].mxu0 %v52
    %v531 = vpop.f32.mrb[0].mxu0
    %v532 = vadd.f32 %v177, %v531
    %v533 = vpop.f32.mrb[0].mxu0
    %v534 = vadd.f32 %v181, %v533
    %535 = vmatprep.mubr.f32.mxu0 0.0
    %536 = vmatmul.mubr.f32.gmra.mrb[0].mxu0 %v53
    %v537 = vpop.f32.mrb[0].mxu0
    %v538 = vadd.f32 %v177, %v537
    %v539 = vpop.f32.mrb[0].mxu0
    %v540 = vadd.f32 %v181, %v539
    %541 = vmatprep.mubr.f32.mxu0 0.0
    %542 = vmatmul.mubr.f32.gmra.mrb[0].mxu0 %v54
    %v543 = vpop.f32.mrb[0].mxu0
    %v544 = vadd.f32 %v177, %v543
    %v545 = vpop.f32.mrb[0].mxu0
    %v546 = vadd.f32 %v181, %v545
    %547 = vmatprep.mubr.f32.mxu0 0.0
    %548 = vmatmul.mubr.f32.gmra.mrb[0].mxu0 %v55
    %v549 = vpop.f32.mrb[0].mxu0
    %v550 = vadd.f32 %v177, %v549
    %v551 = vpop.f32.mrb[0].mxu0
    %v552 = vadd.f32 %v181, %v551
    %553 = vmatprep.mubr.f32.mxu0 0.0
    %554 = vmatmul.mubr.f32.gmra.mrb[0].mxu0 %v56
    %v555 = vpop.f32.mrb[0].mxu0
    %v556 = vadd.f32 %v177, %v555
    %v557 = vpop.f32.mrb[0].mxu0
    %v558 = vadd.f32 %v181, %v557
    %559 = vmatprep.mubr.f32.mxu0 0.0
    %560 = vmatmul.mubr.f32.gmra.mrb[0].mxu0 %v57
    %v561 = vpop.f32.mrb[0].mxu0
    %v562 = vadd.f32 %v177, %v561
    %v563 = vpop.f32.mrb[0].mxu0
    %v564 = vadd.f32 %v181, %v563
    %565 = vmatprep.mubr.f32.mxu0 0.0
    %566 = vmatmul.mubr.f32.gmra.mrb[0].mxu0 %v58
    %v567 = vpop.f32.mrb[0].mxu0
    %v568 = vadd.f32 %v177, %v567
    %v569 = vpop.f32.mrb[0].mxu0
    %v570 = vadd.f32 %v181, %v569
    %571 = vmatprep.mubr.f32.mxu0 0.0
    %572 = vmatmul.mubr.f32.gmra.mrb[0].mxu0 %v59
    %v573 = vpop.f32.mrb[0].mxu0
    %v574 = vadd.f32 %v177, %v573
    %v575 = vpop.f32.mrb[0].mxu0
    %v576 = vadd.f32 %v181, %v575
    %577 = vmatprep.mubr.f32.mxu0 0.0
    %578 = vmatmul.mubr.f32.gmra.mrb[0].mxu0 %v60
    %v579 = vpop.f32.mrb[0].mxu0
    %v580 = vadd.f32 %v177, %v579
    %v581 = vpop.f32.mrb[0].mxu0
    %v582 = vadd.f32 %v181, %v581
    %583 = vmatprep.mubr.f32.mxu0 0.0
    %584 = vmatmul.mubr.f32.gmra.mrb[0].mxu0 %v61
    %v585 = vpop.f32.mrb[0].mxu0
    %v586 = vadd.f32 %v177, %v585
    %v587 = vpop.f32.mrb[0].mxu0
    %v588 = vadd.f32 %v181, %v587
    %589 = vmatprep.mubr.f32.mxu0 0.0
    %590 = vmatmul.mubr.f32.gmra.mrb[0].mxu0 %v62
    %v591 = vpop.f32.mrb[0].mxu0
    %v592 = vadd.f32 %v177, %v591
    %v593 = vpop.f32.mrb[0].mxu0
    %v594 = vadd.f32 %v181, %v593
    %595 = vmatprep.mubr.f32.mxu0 0.0
    %596 = vmatmul.mubr.f32.gmra.mrb[0].mxu0 %v63
    %v597 = vpop.f32.mrb[0].mxu0
    %v598 = vadd.f32 %v177, %v597
    %v599 = vpop.f32.mrb[0].mxu0
    %v600 = vadd.f32 %v181, %v599
    %601 = vmatprep.mubr.f32.mxu0 0.0
    %602 = vmatmul.mubr.f32.gmra.mrb[0].mxu0 %v64
    %v603 = vpop.f32.mrb[0].mxu0
    %v604 = vadd.f32 %v177, %v603
    %v605 = vpop.f32.mrb[0].mxu0
    %v606 = vadd.f32 %v181, %v605
    %607 = vmatprep.mubr.f32.mxu0 0.0
    %608 = vmatmul.mubr.f32.gmra.mrb[0].mxu0 %v65
    %v609 = vpop.f32.mrb[0].mxu0
    %v610 = vadd.f32 %v177, %v609
    %v611 = vpop.f32.mrb[0].mxu0
    %v612 = vadd.f32 %v181, %v611
    %613 = vmatprep.mubr.f32.mxu0 0.0
    %614 = vmatmul.mubr.f32.gmra.mrb[0].mxu0 %v66
    %v615 = vpop.f32.mrb[0].mxu0
    %v616 = vadd.f32 %v177, %v615
    %v617 = vpop.f32.mrb[0].mxu0
    %v618 = vadd.f32 %v181, %v617
    %619 = vmatprep.mubr.f32.mxu0 0.0
    %620 = vmatmul.mubr.f32.gmra.mrb[0].mxu0 %v67
    %v621 = vpop.f32.mrb[0].mxu0
    %v622 = vadd.f32 %v177, %v621
    %v623 = vpop.f32.mrb[0].mxu0
    %v624 = vadd.f32 %v181, %v623
    %625 = vdwg.mxu0
    %626 = vmatprep.subr.mxu0 %v73
    %627 = vmatpush1.msra.mxu0 %v72
    %628 = vmatprep.subr.mxu0 %v79
    %629 = vmatpush1.msra.mxu0 %v78
    %630 = vmatprep.subr.mxu0 %v85
    %631 = vmatpush1.msra.mxu0 %v84
    %632 = vmatprep.subr.mxu0 %v91
    %633 = vmatpush1.msra.mxu0 %v90
    %634 = vmatprep.subr.mxu0 %v97
    %635 = vmatpush1.msra.mxu0 %v96
    %636 = vmatprep.subr.mxu0 %v103
    %637 = vmatpush1.msra.mxu0 %v102
    %638 = vmatprep.subr.mxu0 %v109
    %639 = vmatpush1.msra.mxu0 %v108
    %640 = vmatprep.subr.mxu0 %v115
    %641 = vmatpush1.msra.mxu0 %v114
    %642 = vmatprep.subr.mxu0 %v121
    %643 = vmatpush1.msra.mxu0 %v120
    %644 = vmatprep.subr.mxu0 %v127
    %645 = vmatpush1.msra.mxu0 %v126
    %646 = vmatprep.subr.mxu0 %v133
    %647 = vmatpush1.msra.mxu0 %v132
    %648 = vmatprep.subr.mxu0 %v139
    %649 = vmatpush1.msra.mxu0 %v138
    %650 = vmatprep.subr.mxu0 %v145
    %651 = vmatpush1.msra.mxu0 %v144
    %652 = vmatprep.subr.mxu0 %v151
    %653 = vmatpush1.msra.mxu0 %v150
    %654 = vmatprep.subr.mxu0 %v157
    %655 = vmatpush1.msra.mxu0 %v156
    %656 = vmatprep.subr.mxu0 %v163
    %657 = vmatpush1.msra.mxu0 %v162
    %658 = vmatprep.subr.mxu0 0.0
    %659 = vmatpush1.msra.mxu0 0.0
    %660 = vmatprep.subr.mxu0 0.0
    %661 = vmatpush1.msra.mxu0 0.0
    %662 = vmatprep.subr.mxu0 0.0
    %663 = vmatpush1.msra.mxu0 0.0
    %664 = vmatprep.subr.mxu0 0.0
    %665 = vmatpush1.msra.mxu0 0.0
    %666 = vmatprep.subr.mxu0 0.0
    %667 = vmatpush1.msra.mxu0 0.0
    %668 = vmatprep.subr.mxu0 0.0
    %669 = vmatpush1.msra.mxu0 0.0
    %670 = vmatprep.subr.mxu0 0.0
    %671 = vmatpush1.msra.mxu0 0.0
    %672 = vmatprep.subr.mxu0 0.0
    %673 = vmatpush1.msra.mxu0 0.0
    %674 = vmatprep.subr.mxu0 0.0
    %675 = vmatpush1.msra.mxu0 0.0
    %676 = vmatprep.subr.mxu0 0.0
    %677 = vmatpush1.msra.mxu0 0.0
    %678 = vmatprep.subr.mxu0 0.0
    %679 = vmatpush1.msra.mxu0 0.0
    %680 = vmatprep.subr.mxu0 0.0
    %681 = vmatpush1.msra.mxu0 0.0
    %682 = vmatprep.subr.mxu0 0.0
    %683 = vmatpush1.msra.mxu0 0.0
    %684 = vmatprep.subr.mxu0 0.0
    %685 = vmatpush1.msra.mxu0 0.0
    %686 = vmatprep.subr.mxu0 0.0
    %687 = vmatpush1.msra.mxu0 0.0
    %688 = vmatprep.subr.mxu0 0.0
    %689 = vmatpush1.msra.mxu0 0.0
    %690 = vmatprep.mubr.f32.mxu0 0.0
    %691 = vmatmul.mubr.f32.gmra.mrb[0].mxu0 %v43
    %v692 = vpop.f32.mrb[0].mxu0
    %v693 = vadd.f32 %v185, %v692
    %v694 = vpop.f32.mrb[0].mxu0
    %v695 = vadd.f32 %v189, %v694
    %696 = vmatprep.mubr.f32.mxu0 0.0
    %697 = vmatmul.mubr.f32.gmra.mrb[0].mxu0 %v44
    %v698 = vpop.f32.mrb[0].mxu0
    %v699 = vadd.f32 %v185, %v698
    %v700 = vpop.f32.mrb[0].mxu0
    %v701 = vadd.f32 %v189, %v700
    %702 = vmatprep.mubr.f32.mxu0 0.0
    %703 = vmatmul.mubr.f32.gmra.mrb[0].mxu0 %v45
    %v704 = vpop.f32.mrb[0].mxu0
    %v705 = vadd.f32 %v185, %v704
    %v706 = vpop.f32.mrb[0].mxu0
    %v707 = vadd.f32 %v189, %v706
    %708 = vmatprep.mubr.f32.mxu0 0.0
    %709 = vmatmul.mubr.f32.gmra.mrb[0].mxu0 %v46
    %v710 = vpop.f32.mrb[0].mxu0
    %v711 = vadd.f32 %v185, %v710
    %v712 = vpop.f32.mrb[0].mxu0
    %v713 = vadd.f32 %v189, %v712
    %714 = vmatprep.mubr.f32.mxu0 0.0
    %715 = vmatmul.mubr.f32.gmra.mrb[0].mxu0 %v47
    %v716 = vpop.f32.mrb[0].mxu0
    %v717 = vadd.f32 %v185, %v716
    %v718 = vpop.f32.mrb[0].mxu0
    %v719 = vadd.f32 %v189, %v718
    %720 = vmatprep.mubr.f32.mxu0 0.0
    %721 = vmatmul.mubr.f32.gmra.mrb[0].mxu0 %v48
    %v722 = vpop.f32.mrb[0].mxu0
    %v723 = vadd.f32 %v185, %v722
    %v724 = vpop.f32.mrb[0].mxu0
    %v725 = vadd.f32 %v189, %v724
    %726 = vmatprep.mubr.f32.mxu0 0.0
    %727 = vmatmul.mubr.f32.gmra.mrb[0].mxu0 %v49
    %v728 = vpop.f32.mrb[0].mxu0
    %v729 = vadd.f32 %v185, %v728
    %v730 = vpop.f32.mrb[0].mxu0
    %v731 = vadd.f32 %v189, %v730
    %732 = vmatprep.mubr.f32.mxu0 0.0
    %733 = vmatmul.mubr.f32.gmra.mrb[0].mxu0 %v50
    %v734 = vpop.f32.mrb[0].mxu0
    %v735 = vadd.f32 %v185, %v734
    %v736 = vpop.f32.mrb[0].mxu0
    %v737 = vadd.f32 %v189, %v736
    %738 = vmatprep.mubr.f32.mxu0 0.0
    %739 = vmatmul.mubr.f32.gmra.mrb[0].mxu0 %v51
    %v740 = vpop.f32.mrb[0].mxu0
    %v741 = vadd.f32 %v185, %v740
    %v742 = vpop.f32.mrb[0].mxu0
    %v743 = vadd.f32 %v189, %v742
    %744 = vmatprep.mubr.f32.mxu0 0.0
    %745 = vmatmul.mubr.f32.gmra.mrb[0].mxu0 %v52
    %v746 = vpop.f32.mrb[0].mxu0
    %v747 = vadd.f32 %v185, %v746
    %v748 = vpop.f32.mrb[0].mxu0
    %v749 = vadd.f32 %v189, %v748
    %750 = vmatprep.mubr.f32.mxu0 0.0
    %751 = vmatmul.mubr.f32.gmra.mrb[0].mxu0 %v53
    %v752 = vpop.f32.mrb[0].mxu0
    %v753 = vadd.f32 %v185, %v752
    %v754 = vpop.f32.mrb[0].mxu0
    %v755 = vadd.f32 %v189, %v754
    %756 = vmatprep.mubr.f32.mxu0 0.0
    %757 = vmatmul.mubr.f32.gmra.mrb[0].mxu0 %v54
    %v758 = vpop.f32.mrb[0].mxu0
    %v759 = vadd.f32 %v185, %v758
    %v760 = vpop.f32.mrb[0].mxu0
    %v761 = vadd.f32 %v189, %v760
    %762 = vmatprep.mubr.f32.mxu0 0.0
    %763 = vmatmul.mubr.f32.gmra.mrb[0].mxu0 %v55
    %v764 = vpop.f32.mrb[0].mxu0
    %v765 = vadd.f32 %v185, %v764
    %v766 = vpop.f32.mrb[0].mxu0
    %v767 = vadd.f32 %v189, %v766
    %768 = vmatprep.mubr.f32.mxu0 0.0
    %769 = vmatmul.mubr.f32.gmra.mrb[0].mxu0 %v56
    %v770 = vpop.f32.mrb[0].mxu0
    %v771 = vadd.f32 %v185, %v770
    %v772 = vpop.f32.mrb[0].mxu0
    %v773 = vadd.f32 %v189, %v772
    %774 = vmatprep.mubr.f32.mxu0 0.0
    %775 = vmatmul.mubr.f32.gmra.mrb[0].mxu0 %v57
    %v776 = vpop.f32.mrb[0].mxu0
    %v777 = vadd.f32 %v185, %v776
    %v778 = vpop.f32.mrb[0].mxu0
    %v779 = vadd.f32 %v189, %v778
    %780 = vmatprep.mubr.f32.mxu0 0.0
    %781 = vmatmul.mubr.f32.gmra.mrb[0].mxu0 %v58
    %v782 = vpop.f32.mrb[0].mxu0
    %v783 = vadd.f32 %v185, %v782
    %v784 = vpop.f32.mrb[0].mxu0
    %v785 = vadd.f32 %v189, %v784
    %786 = vmatprep.mubr.f32.mxu0 0.0
    %787 = vmatmul.mubr.f32.gmra.mrb[0].mxu0 %v59
    %v788 = vpop.f32.mrb[0].mxu0
    %v789 = vadd.f32 %v185, %v788
    %v790 = vpop.f32.mrb[0].mxu0
    %v791 = vadd.f32 %v189, %v790
    %792 = vmatprep.mubr.f32.mxu0 0.0
    %793 = vmatmul.mubr.f32.gmra.mrb[0].mxu0 %v60
    %v794 = vpop.f32.mrb[0].mxu0
    %v795 = vadd.f32 %v185, %v794
    %v796 = vpop.f32.mrb[0].mxu0
    %v797 = vadd.f32 %v189, %v796
    %798 = vmatprep.mubr.f32.mxu0 0.0
    %799 = vmatmul.mubr.f32.gmra.mrb[0].mxu0 %v61
    %v800 = vpop.f32.mrb[0].mxu0
    %v801 = vadd.f32 %v185, %v800
    %v802 = vpop.f32.mrb[0].mxu0
    %v803 = vadd.f32 %v189, %v802
    %804 = vmatprep.mubr.f32.mxu0 0.0
    %805 = vmatmul.mubr.f32.gmra.mrb[0].mxu0 %v62
    %v806 = vpop.f32.mrb[0].mxu0
    %v807 = vadd.f32 %v185, %v806
    %v808 = vpop.f32.mrb[0].mxu0
    %v809 = vadd.f32 %v189, %v808
    %810 = vmatprep.mubr.f32.mxu0 0.0
    %811 = vmatmul.mubr.f32.gmra.mrb[0].mxu0 %v63
    %v812 = vpop.f32.mrb[0].mxu0
    %v813 = vadd.f32 %v185, %v812
    %v814 = vpop.f32.mrb[0].mxu0
    %v815 = vadd.f32 %v189, %v814
    %816 = vmatprep.mubr.f32.mxu0 0.0
    %817 = vmatmul.mubr.f32.gmra.mrb[0].mxu0 %v64
    %v818 = vpop.f32.mrb[0].mxu0
    %v819 = vadd.f32 %v185, %v818
    %v820 = vpop.f32.mrb[0].mxu0
    %v821 = vadd.f32 %v189, %v820
    %822 = vmatprep.mubr.f32.mxu0 0.0
    %823 = vmatmul.mubr.f32.gmra.mrb[0].mxu0 %v65
    %v824 = vpop.f32.mrb[0].mxu0
    %v825 = vadd.f32 %v185, %v824
    %v826 = vpop.f32.mrb[0].mxu0
    %v827 = vadd.f32 %v189, %v826
    %828 = vmatprep.mubr.f32.mxu0 0.0
    %829 = vmatmul.mubr.f32.gmra.mrb[0].mxu0 %v66
    %v830 = vpop.f32.mrb[0].mxu0
    %v831 = vadd.f32 %v185, %v830
    %v832 = vpop.f32.mrb[0].mxu0
    %v833 = vadd.f32 %v189, %v832
    %834 = vmatprep.mubr.f32.mxu0 0.0
    %835 = vmatmul.mubr.f32.gmra.mrb[0].mxu0 %v67
    %v836 = vpop.f32.mrb[0].mxu0
    %v837 = vadd.f32 %v185, %v836
    %v838 = vpop.f32.mrb[0].mxu0
    %v839 = vadd.f32 %v189, %v838
    %840 = vdwg.mxu0
    %841 = vst [vmem:[#allocation7] sm:$0xff] %v263
    %842 = vst [vmem:[#allocation7 + $0x8] sm:$0xff] %v265
    %843 = vst [vmem:[#allocation7 + $0x10] sm:$0xff] %v478
    %844 = vst [vmem:[#allocation7 + $0x18] sm:$0xff] %v480
    %845 = vst [vmem:[#allocation7 + $0x20] sm:$0xff] %v693
    %846 = vst [vmem:[#allocation7 + $0x28] sm:$0xff] %v695
    %847 = vst [vmem:[#allocation7 + $0x30] sm:$0xff] %v269
    %848 = vst [vmem:[#allocation7 + $0x38] sm:$0xff] %v271
    %849 = vst [vmem:[#allocation7 + $0x40] sm:$0xff] %v484
    %850 = vst [vmem:[#allocation7 + $0x48] sm:$0xff] %v486
    %851 = vst [vmem:[#allocation7 + $0x50] sm:$0xff] %v699
    %852 = vst [vmem:[#allocation7 + $0x58] sm:$0xff] %v701
    %853 = vst [vmem:[#allocation7 + $0x60] sm:$0xff] %v275
    %854 = vst [vmem:[#allocation7 + $0x68] sm:$0xff] %v277
    %855 = vst [vmem:[#allocation7 + $0x70] sm:$0xff] %v490
    %856 = vst [vmem:[#allocation7 + $0x78] sm:$0xff] %v492
    %857 = vst [vmem:[#allocation7 + $0x80] sm:$0xff] %v705
    %858 = vst [vmem:[#allocation7 + $0x88] sm:$0xff] %v707
    %859 = vst [vmem:[#allocation7 + $0x90] sm:$0xff] %v281
    %860 = vst [vmem:[#allocation7 + $0x98] sm:$0xff] %v283
    %861 = vst [vmem:[#allocation7 + $0xa0] sm:$0xff] %v496
    %862 = vst [vmem:[#allocation7 + $0xa8] sm:$0xff] %v498
    %863 = vst [vmem:[#allocation7 + $0xb0] sm:$0xff] %v711
    %864 = vst [vmem:[#allocation7 + $0xb8] sm:$0xff] %v713
    %865 = vst [vmem:[#allocation7 + $0xc0] sm:$0xff] %v287
    %866 = vst [vmem:[#allocation7 + $0xc8] sm:$0xff] %v289
    %867 = vst [vmem:[#allocation7 + $0xd0] sm:$0xff] %v502
    %868 = vst [vmem:[#allocation7 + $0xd8] sm:$0xff] %v504
    %869 = vst [vmem:[#allocation7 + $0xe0] sm:$0xff] %v717
    %870 = vst [vmem:[#allocation7 + $0xe8] sm:$0xff] %v719
    %871 = vst [vmem:[#allocation7 + $0xf0] sm:$0xff] %v293
    %872 = vst [vmem:[#allocation7 + $0xf8] sm:$0xff] %v295
    %873 = vst [vmem:[#allocation7 + $0x100] sm:$0xff] %v508
    %874 = vst [vmem:[#allocation7 + $0x108] sm:$0xff] %v510
    %875 = vst [vmem:[#allocation7 + $0x110] sm:$0xff] %v723
    %876 = vst [vmem:[#allocation7 + $0x118] sm:$0xff] %v725
    %877 = vst [vmem:[#allocation7 + $0x120] sm:$0xff] %v299
    %878 = vst [vmem:[#allocation7 + $0x128] sm:$0xff] %v301
    %879 = vst [vmem:[#allocation7 + $0x130] sm:$0xff] %v514
    %880 = vst [vmem:[#allocation7 + $0x138] sm:$0xff] %v516
    %881 = vst [vmem:[#allocation7 + $0x140] sm:$0xff] %v729
    %882 = vst [vmem:[#allocation7 + $0x148] sm:$0xff] %v731
    %883 = vst [vmem:[#allocation7 + $0x150] sm:$0xff] %v305
    %884 = vst [vmem:[#allocation7 + $0x158] sm:$0xff] %v307
    %885 = vst [vmem:[#allocation7 + $0x160] sm:$0xff] %v520
    %886 = vst [vmem:[#allocation7 + $0x168] sm:$0xff] %v522
    %887 = vst [vmem:[#allocation7 + $0x170] sm:$0xff] %v735
    %888 = vst [vmem:[#allocation7 + $0x178] sm:$0xff] %v737
    %889 = vst [vmem:[#allocation7 + $0x180] sm:$0xff] %v311
    %890 = vst [vmem:[#allocation7 + $0x188] sm:$0xff] %v313
    %891 = vst [vmem:[#allocation7 + $0x190] sm:$0xff] %v526
    %892 = vst [vmem:[#allocation7 + $0x198] sm:$0xff] %v528
    %893 = vst [vmem:[#allocation7 + $0x1a0] sm:$0xff] %v741
    %894 = vst [vmem:[#allocation7 + $0x1a8] sm:$0xff] %v743
    %895 = vst [vmem:[#allocation7 + $0x1b0] sm:$0xff] %v317
    %896 = vst [vmem:[#allocation7 + $0x1b8] sm:$0xff] %v319
    %897 = vst [vmem:[#allocation7 + $0x1c0] sm:$0xff] %v532
    %898 = vst [vmem:[#allocation7 + $0x1c8] sm:$0xff] %v534
    %899 = vst [vmem:[#allocation7 + $0x1d0] sm:$0xff] %v747
    %900 = vst [vmem:[#allocation7 + $0x1d8] sm:$0xff] %v749
    %901 = vst [vmem:[#allocation7 + $0x1e0] sm:$0xff] %v323
    %902 = vst [vmem:[#allocation7 + $0x1e8] sm:$0xff] %v325
    %903 = vst [vmem:[#allocation7 + $0x1f0] sm:$0xff] %v538
    %904 = vst [vmem:[#allocation7 + $0x1f8] sm:$0xff] %v540
    %905 = vst [vmem:[#allocation7 + $0x200] sm:$0xff] %v753
    %906 = vst [vmem:[#allocation7 + $0x208] sm:$0xff] %v755
    %907 = vst [vmem:[#allocation7 + $0x210] sm:$0xff] %v329
    %908 = vst [vmem:[#allocation7 + $0x218] sm:$0xff] %v331
    %909 = vst [vmem:[#allocation7 + $0x220] sm:$0xff] %v544
    %910 = vst [vmem:[#allocation7 + $0x228] sm:$0xff] %v546
    %911 = vst [vmem:[#allocation7 + $0x230] sm:$0xff] %v759
    %912 = vst [vmem:[#allocation7 + $0x238] sm:$0xff] %v761
    %913 = vst [vmem:[#allocation7 + $0x240] sm:$0xff] %v335
    %914 = vst [vmem:[#allocation7 + $0x248] sm:$0xff] %v337
    %915 = vst [vmem:[#allocation7 + $0x250] sm:$0xff] %v550
    %916 = vst [vmem:[#allocation7 + $0x258] sm:$0xff] %v552
    %917 = vst [vmem:[#allocation7 + $0x260] sm:$0xff] %v765
    %918 = vst [vmem:[#allocation7 + $0x268] sm:$0xff] %v767
    %919 = vst [vmem:[#allocation7 + $0x270] sm:$0xff] %v341
    %920 = vst [vmem:[#allocation7 + $0x278] sm:$0xff] %v343
    %921 = vst [vmem:[#allocation7 + $0x280] sm:$0xff] %v556
    %922 = vst [vmem:[#allocation7 + $0x288] sm:$0xff] %v558
    %923 = vst [vmem:[#allocation7 + $0x290] sm:$0xff] %v771
    %924 = vst [vmem:[#allocation7 + $0x298] sm:$0xff] %v773
    %925 = vst [vmem:[#allocation7 + $0x2a0] sm:$0xff] %v347
    %926 = vst [vmem:[#allocation7 + $0x2a8] sm:$0xff] %v349
    %927 = vst [vmem:[#allocation7 + $0x2b0] sm:$0xff] %v562
    %928 = vst [vmem:[#allocation7 + $0x2b8] sm:$0xff] %v564
    %929 = vst [vmem:[#allocation7 + $0x2c0] sm:$0xff] %v777
    %930 = vst [vmem:[#allocation7 + $0x2c8] sm:$0xff] %v779
    %931 = vst [vmem:[#allocation7 + $0x2d0] sm:$0xff] %v353
    %932 = vst [vmem:[#allocation7 + $0x2d8] sm:$0xff] %v355
    %933 = vst [vmem:[#allocation7 + $0x2e0] sm:$0xff] %v568
    %934 = vst [vmem:[#allocation7 + $0x2e8] sm:$0xff] %v570
    %935 = vst [vmem:[#allocation7 + $0x2f0] sm:$0xff] %v783
    %936 = vst [vmem:[#allocation7 + $0x2f8] sm:$0xff] %v785
    %937 = vst [vmem:[#allocation7 + $0x300] sm:$0xff] %v359
    %938 = vst [vmem:[#allocation7 + $0x308] sm:$0xff] %v361
    %939 = vst [vmem:[#allocation7 + $0x310] sm:$0xff] %v574
    %940 = vst [vmem:[#allocation7 + $0x318] sm:$0xff] %v576
    %941 = vst [vmem:[#allocation7 + $0x320] sm:$0xff] %v789
    %942 = vst [vmem:[#allocation7 + $0x328] sm:$0xff] %v791
    %943 = vst [vmem:[#allocation7 + $0x330] sm:$0xff] %v365
    %944 = vst [vmem:[#allocation7 + $0x338] sm:$0xff] %v367
    %945 = vst [vmem:[#allocation7 + $0x340] sm:$0xff] %v580
    %946 = vst [vmem:[#allocation7 + $0x348] sm:$0xff] %v582
    %947 = vst [vmem:[#allocation7 + $0x350] sm:$0xff] %v795
    %948 = vst [vmem:[#allocation7 + $0x358] sm:$0xff] %v797
    %949 = vst [vmem:[#allocation7 + $0x360] sm:$0xff] %v371
    %950 = vst [vmem:[#allocation7 + $0x368] sm:$0xff] %v373
    %951 = vst [vmem:[#allocation7 + $0x370] sm:$0xff] %v586
    %952 = vst [vmem:[#allocation7 + $0x378] sm:$0xff] %v588
    %953 = vst [vmem:[#allocation7 + $0x380] sm:$0xff] %v801
    %954 = vst [vmem:[#allocation7 + $0x388] sm:$0xff] %v803
    %955 = vst [vmem:[#allocation7 + $0x390] sm:$0xff] %v377
    %956 = vst [vmem:[#allocation7 + $0x398] sm:$0xff] %v379
    %957 = vst [vmem:[#allocation7 + $0x3a0] sm:$0xff] %v592
    %958 = vst [vmem:[#allocation7 + $0x3a8] sm:$0xff] %v594
    %959 = vst [vmem:[#allocation7 + $0x3b0] sm:$0xff] %v807
    %960 = vst [vmem:[#allocation7 + $0x3b8] sm:$0xff] %v809
    %961 = vst [vmem:[#allocation7 + $0x3c0] sm:$0xff] %v383
    %962 = vst [vmem:[#allocation7 + $0x3c8] sm:$0xff] %v385
    %963 = vst [vmem:[#allocation7 + $0x3d0] sm:$0xff] %v598
    %964 = vst [vmem:[#allocation7 + $0x3d8] sm:$0xff] %v600
    %965 = vst [vmem:[#allocation7 + $0x3e0] sm:$0xff] %v813
    %966 = vst [vmem:[#allocation7 + $0x3e8] sm:$0xff] %v815
    %967 = vst [vmem:[#allocation7 + $0x3f0] sm:$0xff] %v389
    %968 = vst [vmem:[#allocation7 + $0x3f8] sm:$0xff] %v391
    %969 = vst [vmem:[#allocation7 + $0x400] sm:$0xff] %v604
    %970 = vst [vmem:[#allocation7 + $0x408] sm:$0xff] %v606
    %971 = vst [vmem:[#allocation7 + $0x410] sm:$0xff] %v819
    %972 = vst [vmem:[#allocation7 + $0x418] sm:$0xff] %v821
    %973 = vst [vmem:[#allocation7 + $0x420] sm:$0xff] %v395
    %974 = vst [vmem:[#allocation7 + $0x428] sm:$0xff] %v397
    %975 = vst [vmem:[#allocation7 + $0x430] sm:$0xff] %v610
    %976 = vst [vmem:[#allocation7 + $0x438] sm:$0xff] %v612
    %977 = vst [vmem:[#allocation7 + $0x440] sm:$0xff] %v825
    %978 = vst [vmem:[#allocation7 + $0x448] sm:$0xff] %v827
    %979 = vst [vmem:[#allocation7 + $0x450] sm:$0xff] %v401
    %980 = vst [vmem:[#allocation7 + $0x458] sm:$0xff] %v403
    %981 = vst [vmem:[#allocation7 + $0x460] sm:$0xff] %v616
    %982 = vst [vmem:[#allocation7 + $0x468] sm:$0xff] %v618
    %983 = vst [vmem:[#allocation7 + $0x470] sm:$0xff] %v831
    %984 = vst [vmem:[#allocation7 + $0x478] sm:$0xff] %v833
    %985 = vst [vmem:[#allocation7 + $0x480] sm:$0xff] %v407
    %986 = vst [vmem:[#allocation7 + $0x488] sm:$0xff] %v409
    %987 = vst [vmem:[#allocation7 + $0x490] sm:$0xff] %v622
    %988 = vst [vmem:[#allocation7 + $0x498] sm:$0xff] %v624
    %989 = vst [vmem:[#allocation7 + $0x4a0] sm:$0xff] %v837
    %990 = vst [vmem:[#allocation7 + $0x4a8] sm:$0xff] %v839
    // Predicated region
    $region22: #{tpu_custom_call.1} parent=1 // pred_check
      _
    $region23: #{tpu_custom_call.1} parent=1 // pred_check_branch
      %992 = sbr.rel (0) target = $region25
    $region24: #{tpu_custom_call.1} parent=1 // pred_region
      %s994 = ssub.s32 19200, 19200
      %995 = vsyncadd [#allocation4], %s994
      %s996 = sshll.u32 [#allocation7], 4
      %s997 = int_to_ptr.vmem [resolvable:$true] %s996
      %1002 = dma.vmem_to_hbm [thread:$0]  %s997, 19200, %s3, [#allocation4], 768, 768, 48
    $region25: #{tpu_custom_call.1} parent=1 // pred_fallthru
      _
    // Predicated region
    $region26: #{tpu_custom_call.1} parent=1 // pred_check
      _
    $region27: #{tpu_custom_call.1} parent=1 // pred_check_branch
      %1004 = sbr.rel (0) target = $region29
    $region28: #{tpu_custom_call.1} parent=1 // pred_region
      %1005 = dma.done [#allocation4], 19200
    $region29: #{tpu_custom_call.1} parent=1 // pred_fallthru
      _
    %1006 = vsyncpa [#allocation3], 1
    %1007 = vsyncpa [#allocation6], 1
    %1008 = vsyncpa [#allocation4], 1

</llo_original>
